<compile_context>
chip_gen: v6e
topology: v6e:2x2x1
jax: 0.10.0
libtpu: 0.0.40
codegen_flags: <defaults>
</compile_context>

<pallas_src>
import jax
import jax.numpy as jnp
from jax.experimental import pallas as pl
from jax.experimental.pallas import tpu as pltpu


def _esi_fused_kernel(x_ref, *refs):
    """refs = (w1, b1, w2, b2, ..., w5, b5, out). Static (unrolled) layer loop."""
    o_ref = refs[-1]
    p_refs = refs[:-1]
    h = x_ref[...].astype(jnp.bfloat16)           # MXU-native LHS
    y = None
    for li in range(5):
        w = p_refs[2 * li][...]                    # bf16 (K, N), BN folded in
        b = p_refs[2 * li + 1][...]                # f32 (1, N), BN folded in
        y = jnp.dot(h, w, preferred_element_type=jnp.float32) + b
        if li < 4:                                 # relu for all but the last layer
            h = jnp.maximum(y, 0.0).astype(jnp.bfloat16)
    o_ref[...] = y                                 # f32, lane-padded to 128


def _round_up(x, m):
    return ((x + m - 1) // m) * m


def esi_model_forward(x, flat_params):
    """x: (batch, input_size) f32. flat_params: [w1,b1,...,w5,b5] (padded, folded)."""
    M, K = x.shape
    K_pad = flat_params[0].shape[0]                # 128-multiple input features
    M_pad = _round_up(max(M, 8), 8)                # sublane-aligned batch
    x_p = jnp.zeros((M_pad, K_pad), x.dtype).at[:M, :K].set(x)

    n_out_padded = flat_params[-1].shape[1]        # 128 (lane-padded logits)
    vmem = pl.BlockSpec(memory_space=pltpu.MemorySpace.VMEM)
    out = pl.pallas_call(
        _esi_fused_kernel,
        out_shape=jax.ShapeDtypeStruct((M_pad, n_out_padded), jnp.float32),
        in_specs=[vmem] * (1 + len(flat_params)),
        out_specs=vmem,
    )(x_p, *flat_params)
    return out[:M, :5]                             # drop batch / lane padding


def init_params(key, input_size):
    """Deterministic synthetic params matching EsiModel.__init__ shapes.

    Returns a flat list [w1, b1, ..., w5, b5] with eval-mode BatchNorm folded
    into (w, b), all matmul dims zero-padded to lane-dense shapes, and weights
    cast to bf16.
    """
    in_pad0 = _round_up(input_size, 128)
    dims = [input_size, 512, 256, 128, 64, 5]
    in_pads = [in_pad0, 512, 256, 128, 128]        # fc5 input padded 64 -> 128
    out_pads = [512, 256, 128, 128, 128]           # 64 -> 128, 5 -> 128
    flat = []
    for li in range(5):
        fan_in, fan_out = dims[li], dims[li + 1]
        key, kw, kb, kg, kbeta, km, kv = jax.random.split(key, 7)
        bound = 1.0 / (fan_in ** 0.5)
        # PyTorch Linear: weight (out, in); store transposed (in, out).
        w = jax.random.uniform(kw, (fan_in, fan_out), jnp.float32, -bound, bound)
        b = jax.random.uniform(kb, (1, fan_out), jnp.float32, -bound, bound)
        if li < 4:  # layers followed by BatchNorm1d (eval mode) -> fold into w, b
            gamma = 1.0 + 0.1 * jax.random.normal(kg, (1, fan_out), jnp.float32)
            beta = 0.1 * jax.random.normal(kbeta, (1, fan_out), jnp.float32)
            run_mean = 0.1 * jax.random.normal(km, (1, fan_out), jnp.float32)
            run_var = jnp.abs(1.0 + 0.1 * jax.random.normal(kv, (1, fan_out),
                                                            jnp.float32))
            eps = 1e-5
            scale = gamma / jnp.sqrt(run_var + eps)
            shift = beta - run_mean * scale
            w = w * scale                          # fold BN scale into columns
            b = b * scale + shift                  # fold BN shift into bias
        # zero-pad to lane-dense shapes (padding is inert: zero rows x zero acts)
        w_p = jnp.zeros((in_pads[li], out_pads[li]), jnp.float32)
        w_p = w_p.at[:fan_in, :fan_out].set(w)
        b_p = jnp.zeros((1, out_pads[li]), jnp.float32)
        b_p = b_p.at[:, :fan_out].set(b)
        flat += [w_p.astype(jnp.bfloat16), b_p]
    return flat


def esi_model_ref(x, flat_params):
    """Pure-JAX reference mirroring the kernel math (bf16 operands, f32 accum)."""
    M, K = x.shape
    K_pad = flat_params[0].shape[0]
    h = jnp.zeros((M, K_pad), x.dtype).at[:, :K].set(x)
    for li in range(5):
        w = flat_params[2 * li].astype(jnp.float32)
        b = flat_params[2 * li + 1]
        h = jnp.dot(h.astype(jnp.bfloat16).astype(jnp.float32), w) + b
        if li < 4:
            h = jnp.maximum(h, 0.0)
    return h[:, :5]


if __name__ == "__main__":
    batch = 8
    input_size = 32
    key = jax.random.PRNGKey(0)
    key, kx = jax.random.split(key)
    x = jax.random.normal(kx, (batch, input_size), jnp.float32)

    params = init_params(key, input_size)

    out = esi_model_forward(x, params)
    out = jax.block_until_ready(out)

    ref = esi_model_ref(x, params)
    assert out.shape == (batch, 5), out.shape
    assert jnp.allclose(out, ref, atol=2e-3, rtol=2e-3), "mismatch vs reference"
    print("KERNEL_OK")
</pallas_src>

<mosaic_0001>
module attributes {stable_mosaic.version = 11 : i64} {
  func.func @_esi_fused_kernel(%arg0: memref<8x128xf32, #tpu.memory_space<vmem>>, %arg1: memref<128x512xbf16, #tpu.memory_space<vmem>>, %arg2: memref<1x512xf32, #tpu.memory_space<vmem>>, %arg3: memref<512x256xbf16, #tpu.memory_space<vmem>>, %arg4: memref<1x256xf32, #tpu.memory_space<vmem>>, %arg5: memref<256x128xbf16, #tpu.memory_space<vmem>>, %arg6: memref<1x128xf32, #tpu.memory_space<vmem>>, %arg7: memref<128x128xbf16, #tpu.memory_space<vmem>>, %arg8: memref<1x128xf32, #tpu.memory_space<vmem>>, %arg9: memref<128x128xbf16, #tpu.memory_space<vmem>>, %arg10: memref<1x128xf32, #tpu.memory_space<vmem>>, %arg11: memref<8x128xf32, #tpu.memory_space<vmem>>) attributes {dimension_semantics = [], scalar_prefetch = 0 : i64, scratch_operands = 0 : i64, tpu.core_type = #tpu.core_type<tc>} {
    %c0 = arith.constant 0 : index
    %c0_0 = arith.constant 0 : index
    %0 = vector.load %arg0[%c0, %c0_0] : memref<8x128xf32, #tpu.memory_space<vmem>>, vector<8x128xf32>
    %1 = arith.truncf %0 : vector<8x128xf32> to vector<8x128xbf16>
    %c0_1 = arith.constant 0 : index
    %c0_2 = arith.constant 0 : index
    %2 = vector.load %arg1[%c0_1, %c0_2] : memref<128x512xbf16, #tpu.memory_space<vmem>>, vector<128x512xbf16>
    %c0_3 = arith.constant 0 : index
    %c0_4 = arith.constant 0 : index
    %3 = vector.load %arg2[%c0_3, %c0_4] : memref<1x512xf32, #tpu.memory_space<vmem>>, vector<1x512xf32>
    %cst = arith.constant dense<0.000000e+00> : vector<8x512xf32>
    %4 = tpu.matmul %1, %2, %cst {dimension_numbers = #tpu.dot_dimension_numbers<[1], [0], [0], [1], [0, 0, 1, 1], [], []>} : vector<8x128xbf16>, vector<128x512xbf16>, vector<8x512xf32> -> vector<8x512xf32>
    %5 = vector.broadcast %3 : vector<1x512xf32> to vector<8x512xf32>
    %6 = arith.addf %4, %5 : vector<8x512xf32>
    %cst_5 = arith.constant 0.000000e+00 : f32
    %7 = vector.broadcast %cst_5 : f32 to vector<8x512xf32>
    %8 = arith.maximumf %6, %7 : vector<8x512xf32>
    %9 = arith.truncf %8 : vector<8x512xf32> to vector<8x512xbf16>
    %c0_6 = arith.constant 0 : index
    %c0_7 = arith.constant 0 : index
    %10 = vector.load %arg3[%c0_6, %c0_7] : memref<512x256xbf16, #tpu.memory_space<vmem>>, vector<512x256xbf16>
    %c0_8 = arith.constant 0 : index
    %c0_9 = arith.constant 0 : index
    %11 = vector.load %arg4[%c0_8, %c0_9] : memref<1x256xf32, #tpu.memory_space<vmem>>, vector<1x256xf32>
    %cst_10 = arith.constant dense<0.000000e+00> : vector<8x256xf32>
    %12 = tpu.matmul %9, %10, %cst_10 {dimension_numbers = #tpu.dot_dimension_numbers<[1], [0], [0], [1], [0, 0, 1, 1], [], []>} : vector<8x512xbf16>, vector<512x256xbf16>, vector<8x256xf32> -> vector<8x256xf32>
    %13 = vector.broadcast %11 : vector<1x256xf32> to vector<8x256xf32>
    %14 = arith.addf %12, %13 : vector<8x256xf32>
    %cst_11 = arith.constant 0.000000e+00 : f32
    %15 = vector.broadcast %cst_11 : f32 to vector<8x256xf32>
    %16 = arith.maximumf %14, %15 : vector<8x256xf32>
    %17 = arith.truncf %16 : vector<8x256xf32> to vector<8x256xbf16>
    %c0_12 = arith.constant 0 : index
    %c0_13 = arith.constant 0 : index
    %18 = vector.load %arg5[%c0_12, %c0_13] : memref<256x128xbf16, #tpu.memory_space<vmem>>, vector<256x128xbf16>
    %c0_14 = arith.constant 0 : index
    %c0_15 = arith.constant 0 : index
    %19 = vector.load %arg6[%c0_14, %c0_15] : memref<1x128xf32, #tpu.memory_space<vmem>>, vector<1x128xf32>
    %cst_16 = arith.constant dense<0.000000e+00> : vector<8x128xf32>
    %20 = tpu.matmul %17, %18, %cst_16 {dimension_numbers = #tpu.dot_dimension_numbers<[1], [0], [0], [1], [0, 0, 1, 1], [], []>} : vector<8x256xbf16>, vector<256x128xbf16>, vector<8x128xf32> -> vector<8x128xf32>
    %21 = vector.broadcast %19 : vector<1x128xf32> to vector<8x128xf32>
    %22 = arith.addf %20, %21 : vector<8x128xf32>
    %cst_17 = arith.constant 0.000000e+00 : f32
    %23 = vector.broadcast %cst_17 : f32 to vector<8x128xf32>
    %24 = arith.maximumf %22, %23 : vector<8x128xf32>
    %25 = arith.truncf %24 : vector<8x128xf32> to vector<8x128xbf16>
    %c0_18 = arith.constant 0 : index
    %c0_19 = arith.constant 0 : index
    %26 = vector.load %arg7[%c0_18, %c0_19] : memref<128x128xbf16, #tpu.memory_space<vmem>>, vector<128x128xbf16>
    %c0_20 = arith.constant 0 : index
    %c0_21 = arith.constant 0 : index
    %27 = vector.load %arg8[%c0_20, %c0_21] : memref<1x128xf32, #tpu.memory_space<vmem>>, vector<1x128xf32>
    %cst_22 = arith.constant dense<0.000000e+00> : vector<8x128xf32>
    %28 = tpu.matmul %25, %26, %cst_22 {dimension_numbers = #tpu.dot_dimension_numbers<[1], [0], [0], [1], [0, 0, 1, 1], [], []>} : vector<8x128xbf16>, vector<128x128xbf16>, vector<8x128xf32> -> vector<8x128xf32>
    %29 = vector.broadcast %27 : vector<1x128xf32> to vector<8x128xf32>
    %30 = arith.addf %28, %29 : vector<8x128xf32>
    %cst_23 = arith.constant 0.000000e+00 : f32
    %31 = vector.broadcast %cst_23 : f32 to vector<8x128xf32>
    %32 = arith.maximumf %30, %31 : vector<8x128xf32>
    %33 = arith.truncf %32 : vector<8x128xf32> to vector<8x128xbf16>
    %c0_24 = arith.constant 0 : index
    %c0_25 = arith.constant 0 : index
    %34 = vector.load %arg9[%c0_24, %c0_25] : memref<128x128xbf16, #tpu.memory_space<vmem>>, vector<128x128xbf16>
    %c0_26 = arith.constant 0 : index
    %c0_27 = arith.constant 0 : index
    %35 = vector.load %arg10[%c0_26, %c0_27] : memref<1x128xf32, #tpu.memory_space<vmem>>, vector<1x128xf32>
    %cst_28 = arith.constant dense<0.000000e+00> : vector<8x128xf32>
    %36 = tpu.matmul %33, %34, %cst_28 {dimension_numbers = #tpu.dot_dimension_numbers<[1], [0], [0], [1], [0, 0, 1, 1], [], []>} : vector<8x128xbf16>, vector<128x128xbf16>, vector<8x128xf32> -> vector<8x128xf32>
    %37 = vector.broadcast %35 : vector<1x128xf32> to vector<8x128xf32>
    %38 = arith.addf %36, %37 : vector<8x128xf32>
    %c0_29 = arith.constant 0 : index
    %c0_30 = arith.constant 0 : index
    %39 = vector.load %arg11[%c0_29, %c0_30] : memref<8x128xf32, #tpu.memory_space<vmem>>, vector<8x128xf32>
    tpu.vector_store %arg11[%c0_29, %c0_30], %38 {strides = array<i32>} : memref<8x128xf32, #tpu.memory_space<vmem>>, vector<8x128xf32>,
    return
  }
}

</mosaic_0001>

<llo_original>
// kernel: tpu_custom_call.1
$region0: #{tpu_custom_call.1}
  #allocation0 [shape = 'u32[]', space=smem, size = 0x4, offset = 0x4, fixed_abs, tag = 'smem constant byte address 0x4 - core index']
  #allocation1 [shape = 'u32[144,128]{1,0:T(1,128)}', space=vmem, size = 0x12000, scoped, tag = 'internal scratch']
  %s0 = inlined_call_operand.hbm [shape: f32[8,128], index: 0, kind: input, shape index: {}]
  %s1 = inlined_call_operand.hbm [shape: bf16[128,512], index: 1, kind: input, shape index: {}]
  %s2 = inlined_call_operand.hbm [shape: f32[1,512], index: 2, kind: input, shape index: {}]
  %s3 = inlined_call_operand.hbm [shape: bf16[512,256], index: 3, kind: input, shape index: {}]
  %s4 = inlined_call_operand.vmem [shape: f32[1,256], index: 4, kind: input, shape index: {}]
  %s5 = inlined_call_operand.hbm [shape: bf16[256,128], index: 5, kind: input, shape index: {}]
  %s6 = inlined_call_operand.vmem [shape: f32[1,128], index: 6, kind: input, shape index: {}]
  %s7 = inlined_call_operand.hbm [shape: bf16[128,128], index: 7, kind: input, shape index: {}]
  %s8 = inlined_call_operand.vmem [shape: f32[1,128], index: 8, kind: input, shape index: {}]
  %s9 = inlined_call_operand.hbm [shape: bf16[128,128], index: 9, kind: input, shape index: {}]
  %s10 = inlined_call_operand.vmem [shape: f32[1,128], index: 10, kind: input, shape index: {}]
  %s11 = inlined_call_operand.hbm [shape: f32[8,128], index: 11, kind: output, shape index: {}]
  %s12 = sld [smem:[#allocation0]]
  $region82: #{tpu_custom_call.1} parent=0
    _
  %s14 = ssub.s32 1, %s12
  %s15 = scalar_select 0, %s14, %s12
  $region1: #{tpu_custom_call.1} parent=0
    #allocation2 [shape = 'u8[4096]{0}', space=vmem, size = 0x1000, scoped, tag = 'input window, operand 0, single buffered']
    #allocation3 [shape = 's32[1]{0}', space=sflag, size = 0x4, scoped, tag = 'scoped memory for tpu_custom_call.1']
    #allocation4 [shape = 's32[1]{0}', space=sflag, size = 0x4, scoped, tag = 'scoped memory for tpu_custom_call.1']
    #allocation5 [shape = 'u8[131072]{0}', space=vmem, size = 0x20000, scoped, tag = 'input window, operand 1, single buffered']
    #allocation6 [shape = 's32[1]{0}', space=sflag, size = 0x4, scoped, tag = 'scoped memory for tpu_custom_call.1']
    #allocation7 [shape = 'u8[2048]{0}', space=vmem, size = 0x800, scoped, tag = 'input window, operand 2, single buffered']
    #allocation8 [shape = 'u8[262144]{0}', space=vmem, size = 0x40000, scoped, tag = 'input window, operand 3, single buffered']
    #allocation9 [shape = 's32[1]{0}', space=sflag, size = 0x4, scoped, tag = 'scoped memory for tpu_custom_call.1']
    #allocation10 [shape = 'u8[65536]{0}', space=vmem, size = 0x10000, scoped, tag = 'input window, operand 5, single buffered']
    #allocation11 [shape = 'u8[32768]{0}', space=vmem, size = 0x8000, scoped, tag = 'input window, operand 7, single buffered']
    #allocation12 [shape = 's32[1]{0}', space=sflag, size = 0x4, scoped, tag = 'scoped memory for tpu_custom_call.1']
    #allocation13 [shape = 'u8[32768]{0}', space=vmem, size = 0x8000, scoped, tag = 'input window, operand 9, single buffered']
    #allocation14 [shape = 'u8[4096]{0}', space=vmem, size = 0x1000, scoped, tag = 'output window, operand 0, single buffered']
    %16 = vsyncpa [#allocation3], 0
    %17 = vsyncpa [#allocation6], 0
    %18 = vsyncpa [#allocation9], 0
    %19 = vsyncpa [#allocation12], 0
    %20 = vsyncpa [#allocation4], 0
    // Predicated region
    $region2: #{tpu_custom_call.1} parent=1 // pred_check
      _
    $region3: #{tpu_custom_call.1} parent=1 // pred_check_branch
      %22 = sbr.rel (0) target = $region5
    $region4: #{tpu_custom_call.1} parent=1 // pred_region
      %s24 = ssub.s32 128, 128
      %25 = vsyncadd [#allocation3], %s24
      %s27 = sshll.u32 [#allocation2], 4
      %s28 = int_to_ptr.vmem [resolvable:$true] %s27
      %30 = dma.hbm_to_vmem [thread:$0]  %s0, 128, %s28, [#allocation3]
    $region5: #{tpu_custom_call.1} parent=1 // pred_fallthru
      _
    // Predicated region
    $region6: #{tpu_custom_call.1} parent=1 // pred_check
      _
    $region7: #{tpu_custom_call.1} parent=1 // pred_check_branch
      %32 = sbr.rel (0) target = $region9
    $region8: #{tpu_custom_call.1} parent=1 // pred_region
      %s34 = ssub.s32 4096, 4096
      %35 = vsyncadd [#allocation6], %s34
      %s36 = sshll.u32 [#allocation5], 4
      %s37 = int_to_ptr.vmem [resolvable:$true] %s36
      %42 = dma.hbm_to_vmem [thread:$0]  %s1, 4096, %s37, [#allocation6], 256, 256, 16
    $region9: #{tpu_custom_call.1} parent=1 // pred_fallthru
      _
    // Predicated region
    $region10: #{tpu_custom_call.1} parent=1 // pred_check
      _
    $region11: #{tpu_custom_call.1} parent=1 // pred_check_branch
      %44 = sbr.rel (0) target = $region13
    $region12: #{tpu_custom_call.1} parent=1 // pred_region
      %s46 = ssub.s32 64, 64
      %47 = vsyncadd [#allocation6], %s46
      %s49 = sshll.u32 [#allocation7], 4
      %s50 = int_to_ptr.vmem [resolvable:$true] %s49
      %52 = dma.hbm_to_vmem [thread:$0]  %s2, 64, %s50, [#allocation6]
    $region13: #{tpu_custom_call.1} parent=1 // pred_fallthru
      _
    // Predicated region
    $region14: #{tpu_custom_call.1} parent=1 // pred_check
      _
    $region15: #{tpu_custom_call.1} parent=1 // pred_check_branch
      %54 = sbr.rel (0) target = $region17
    $region16: #{tpu_custom_call.1} parent=1 // pred_region
      %s56 = ssub.s32 8192, 8192
      %57 = vsyncadd [#allocation9], %s56
      %s58 = sshll.u32 [#allocation8], 4
      %s59 = int_to_ptr.vmem [resolvable:$true] %s58
      %64 = dma.hbm_to_vmem [thread:$0]  %s3, 8192, %s59, [#allocation9], 128, 128, 8
    $region17: #{tpu_custom_call.1} parent=1 // pred_fallthru
      _
    // Predicated region
    $region18: #{tpu_custom_call.1} parent=1 // pred_check
      _
    $region19: #{tpu_custom_call.1} parent=1 // pred_check_branch
      %66 = sbr.rel (0) target = $region21
    $region20: #{tpu_custom_call.1} parent=1 // pred_region
      _
    $region21: #{tpu_custom_call.1} parent=1 // pred_fallthru
      _
    // Predicated region
    $region22: #{tpu_custom_call.1} parent=1 // pred_check
      _
    $region23: #{tpu_custom_call.1} parent=1 // pred_check_branch
      %68 = sbr.rel (0) target = $region25
    $region24: #{tpu_custom_call.1} parent=1 // pred_region
      %s70 = ssub.s32 2048, 2048
      %71 = vsyncadd [#allocation9], %s70
      %s72 = sshll.u32 [#allocation10], 4
      %s73 = int_to_ptr.vmem [resolvable:$true] %s72
      %78 = dma.hbm_to_vmem [thread:$0]  %s5, 2048, %s73, [#allocation9], 64, 64, 4
    $region25: #{tpu_custom_call.1} parent=1 // pred_fallthru
      _
    // Predicated region
    $region26: #{tpu_custom_call.1} parent=1 // pred_check
      _
    $region27: #{tpu_custom_call.1} parent=1 // pred_check_branch
      %80 = sbr.rel (0) target = $region29
    $region28: #{tpu_custom_call.1} parent=1 // pred_region
      _
    $region29: #{tpu_custom_call.1} parent=1 // pred_fallthru
      _
    // Predicated region
    $region30: #{tpu_custom_call.1} parent=1 // pred_check
      _
    $region31: #{tpu_custom_call.1} parent=1 // pred_check_branch
      %82 = sbr.rel (0) target = $region33
    $region32: #{tpu_custom_call.1} parent=1 // pred_region
      %s84 = ssub.s32 1024, 1024
      %85 = vsyncadd [#allocation12], %s84
      %s86 = sshll.u32 [#allocation11], 4
      %s87 = int_to_ptr.vmem [resolvable:$true] %s86
      %92 = dma.hbm_to_vmem [thread:$0]  %s7, 1024, %s87, [#allocation12], 64, 64, 4
    $region33: #{tpu_custom_call.1} parent=1 // pred_fallthru
      _
    // Predicated region
    $region34: #{tpu_custom_call.1} parent=1 // pred_check
      _
    $region35: #{tpu_custom_call.1} parent=1 // pred_check_branch
      %94 = sbr.rel (0) target = $region37
    $region36: #{tpu_custom_call.1} parent=1 // pred_region
      _
    $region37: #{tpu_custom_call.1} parent=1 // pred_fallthru
      _
    // Predicated region
    $region38: #{tpu_custom_call.1} parent=1 // pred_check
      _
    $region39: #{tpu_custom_call.1} parent=1 // pred_check_branch
      %96 = sbr.rel (0) target = $region41
    $region40: #{tpu_custom_call.1} parent=1 // pred_region
      %s98 = ssub.s32 1024, 1024
      %99 = vsyncadd [#allocation12], %s98
      %s100 = sshll.u32 [#allocation13], 4
      %s101 = int_to_ptr.vmem [resolvable:$true] %s100
      %106 = dma.hbm_to_vmem [thread:$0]  %s9, 1024, %s101, [#allocation12], 64, 64, 4
    $region41: #{tpu_custom_call.1} parent=1 // pred_fallthru
      _
    // Predicated region
    $region42: #{tpu_custom_call.1} parent=1 // pred_check
      _
    $region43: #{tpu_custom_call.1} parent=1 // pred_check_branch
      %108 = sbr.rel (0) target = $region45
    $region44: #{tpu_custom_call.1} parent=1 // pred_region
      _
    $region45: #{tpu_custom_call.1} parent=1 // pred_fallthru
      _
    // Predicated region
    $region46: #{tpu_custom_call.1} parent=1 // pred_check
      _
    $region47: #{tpu_custom_call.1} parent=1 // pred_check_branch
      %110 = sbr.rel (0) target = $region49
    $region48: #{tpu_custom_call.1} parent=1 // pred_region
      %111 = dma.done [#allocation3], 128
    $region49: #{tpu_custom_call.1} parent=1 // pred_fallthru
      _
    // Predicated region
    $region50: #{tpu_custom_call.1} parent=1 // pred_check
      _
    $region51: #{tpu_custom_call.1} parent=1 // pred_check_branch
      %113 = sbr.rel (0) target = $region53
    $region52: #{tpu_custom_call.1} parent=1 // pred_region
      %114 = dma.done [#allocation6], 4096
    $region53: #{tpu_custom_call.1} parent=1 // pred_fallthru
      _
    // Predicated region
    $region54: #{tpu_custom_call.1} parent=1 // pred_check
      _
    $region55: #{tpu_custom_call.1} parent=1 // pred_check_branch
      %116 = sbr.rel (0) target = $region57
    $region56: #{tpu_custom_call.1} parent=1 // pred_region
      %117 = dma.done [#allocation6], 64
    $region57: #{tpu_custom_call.1} parent=1 // pred_fallthru
      _
    // Predicated region
    $region58: #{tpu_custom_call.1} parent=1 // pred_check
      _
    $region59: #{tpu_custom_call.1} parent=1 // pred_check_branch
      %119 = sbr.rel (0) target = $region61
    $region60: #{tpu_custom_call.1} parent=1 // pred_region
      %120 = dma.done [#allocation9], 8192
    $region61: #{tpu_custom_call.1} parent=1 // pred_fallthru
      _
    // Predicated region
    $region62: #{tpu_custom_call.1} parent=1 // pred_check
      _
    $region63: #{tpu_custom_call.1} parent=1 // pred_check_branch
      %122 = sbr.rel (0) target = $region65
    $region64: #{tpu_custom_call.1} parent=1 // pred_region
      %123 = dma.done [#allocation9], 2048
    $region65: #{tpu_custom_call.1} parent=1 // pred_fallthru
      _
    // Predicated region
    $region66: #{tpu_custom_call.1} parent=1 // pred_check
      _
    $region67: #{tpu_custom_call.1} parent=1 // pred_check_branch
      %125 = sbr.rel (0) target = $region69
    $region68: #{tpu_custom_call.1} parent=1 // pred_region
      %126 = dma.done [#allocation12], 1024
    $region69: #{tpu_custom_call.1} parent=1 // pred_fallthru
      _
    // Predicated region
    $region70: #{tpu_custom_call.1} parent=1 // pred_check
      _
    $region71: #{tpu_custom_call.1} parent=1 // pred_check_branch
      %128 = sbr.rel (0) target = $region73
    $region72: #{tpu_custom_call.1} parent=1 // pred_region
      %129 = dma.done [#allocation12], 1024
    $region73: #{tpu_custom_call.1} parent=1 // pred_fallthru
      _
    %v131 = vld [vmem:[#allocation2] sm:$0xff]
    %v132 = vpack.c.bf16 %v131, %v131
    %v133 = vld [vmem:[#allocation5] sm:$0xff]
    %v134 = vld [vmem:[#allocation5 + $0x8] sm:$0xff]
    %v135 = vld [vmem:[#allocation5 + $0x10] sm:$0xff]
    %v136 = vld [vmem:[#allocation5 + $0x18] sm:$0xff]
    %v137 = vld [vmem:[#allocation5 + $0x20] sm:$0xff]
    %v138 = vld [vmem:[#allocation5 + $0x28] sm:$0xff]
    %v139 = vld [vmem:[#allocation5 + $0x30] sm:$0xff]
    %v140 = vld [vmem:[#allocation5 + $0x38] sm:$0xff]
    %v141 = vld [vmem:[#allocation5 + $0x40] sm:$0xff]
    %v142 = vld [vmem:[#allocation5 + $0x48] sm:$0xff]
    %v143 = vld [vmem:[#allocation5 + $0x50] sm:$0xff]
    %v144 = vld [vmem:[#allocation5 + $0x58] sm:$0xff]
    %v145 = vld [vmem:[#allocation5 + $0x60] sm:$0xff]
    %v146 = vld [vmem:[#allocation5 + $0x68] sm:$0xff]
    %v147 = vld [vmem:[#allocation5 + $0x70] sm:$0xff]
    %v148 = vld [vmem:[#allocation5 + $0x78] sm:$0xff]
    %v149 = vld [vmem:[#allocation5 + $0x80] sm:$0xff]
    %v150 = vld [vmem:[#allocation5 + $0x88] sm:$0xff]
    %v151 = vld [vmem:[#allocation5 + $0x90] sm:$0xff]
    %v152 = vld [vmem:[#allocation5 + $0x98] sm:$0xff]
    %v153 = vld [vmem:[#allocation5 + $0xa0] sm:$0xff]
    %v154 = vld [vmem:[#allocation5 + $0xa8] sm:$0xff]
    %v155 = vld [vmem:[#allocation5 + $0xb0] sm:$0xff]
    %v156 = vld [vmem:[#allocation5 + $0xb8] sm:$0xff]
    %v157 = vld [vmem:[#allocation5 + $0xc0] sm:$0xff]
    %v158 = vld [vmem:[#allocation5 + $0xc8] sm:$0xff]
    %v159 = vld [vmem:[#allocation5 + $0xd0] sm:$0xff]
    %v160 = vld [vmem:[#allocation5 + $0xd8] sm:$0xff]
    %v161 = vld [vmem:[#allocation5 + $0xe0] sm:$0xff]
    %v162 = vld [vmem:[#allocation5 + $0xe8] sm:$0xff]
    %v163 = vld [vmem:[#allocation5 + $0xf0] sm:$0xff]
    %v164 = vld [vmem:[#allocation5 + $0xf8] sm:$0xff]
    %v165 = vld [vmem:[#allocation7] sm:$0xf]
    %v167 = vlaneseq
    %v168 = vshrl.u32 %v167, 7
    %v169 = vsub.s32 0, %v168
    %v170 = vrot.slane %v165, %v169
    %v171 = vlaneseq
    %v172 = vshrl.u32 %v171, 7
    %v173 = vsub.s32 1, %v172
    %v174 = vrot.slane %v165, %v173
    %v175 = vlaneseq
    %v176 = vshrl.u32 %v175, 7
    %v177 = vsub.s32 2, %v176
    %v178 = vrot.slane %v165, %v177
    %v179 = vlaneseq
    %v180 = vshrl.u32 %v179, 7
    %v181 = vsub.s32 3, %v180
    %v182 = vrot.slane %v165, %v181
    %v219 = vunpack.c.l.b16 %v133
    %v220 = vunpack.c.h.b16 %v133
    %v221 = vunpack.c.l.b16 %v134
    %v222 = vunpack.c.h.b16 %v134
    %v223 = vunpack.c.l.b16 %v135
    %v224 = vunpack.c.h.b16 %v135
    %v225 = vunpack.c.l.b16 %v136
    %v226 = vunpack.c.h.b16 %v136
    %v227 = vunpack.c.l.b16 %v137
    %v228 = vunpack.c.h.b16 %v137
    %v229 = vunpack.c.l.b16 %v138
    %v230 = vunpack.c.h.b16 %v138
    %v231 = vunpack.c.l.b16 %v139
    %v232 = vunpack.c.h.b16 %v139
    %v233 = vunpack.c.l.b16 %v140
    %v234 = vunpack.c.h.b16 %v140
    %v235 = vunpack.c.l.b16 %v141
    %v236 = vunpack.c.h.b16 %v141
    %v237 = vunpack.c.l.b16 %v142
    %v238 = vunpack.c.h.b16 %v142
    %v239 = vunpack.c.l.b16 %v143
    %v240 = vunpack.c.h.b16 %v143
    %v241 = vunpack.c.l.b16 %v144
    %v242 = vunpack.c.h.b16 %v144
    %v243 = vunpack.c.l.b16 %v145
    %v244 = vunpack.c.h.b16 %v145
    %v245 = vunpack.c.l.b16 %v146
    %v246 = vunpack.c.h.b16 %v146
    %v247 = vunpack.c.l.b16 %v147
    %v248 = vunpack.c.h.b16 %v147
    %v249 = vunpack.c.l.b16 %v148
    %v250 = vunpack.c.h.b16 %v148
    %v251 = vunpack.c.l.b16 %v149
    %v252 = vunpack.c.h.b16 %v149
    %v253 = vunpack.c.l.b16 %v150
    %v254 = vunpack.c.h.b16 %v150
    %v255 = vunpack.c.l.b16 %v151
    %v256 = vunpack.c.h.b16 %v151
    %v257 = vunpack.c.l.b16 %v152
    %v258 = vunpack.c.h.b16 %v152
    %v259 = vunpack.c.l.b16 %v153
    %v260 = vunpack.c.h.b16 %v153
    %v261 = vunpack.c.l.b16 %v154
    %v262 = vunpack.c.h.b16 %v154
    %v263 = vunpack.c.l.b16 %v155
    %v264 = vunpack.c.h.b16 %v155
    %v265 = vunpack.c.l.b16 %v156
    %v266 = vunpack.c.h.b16 %v156
    %v267 = vunpack.c.l.b16 %v157
    %v268 = vunpack.c.h.b16 %v157
    %v269 = vunpack.c.l.b16 %v158
    %v270 = vunpack.c.h.b16 %v158
    %v271 = vunpack.c.l.b16 %v159
    %v272 = vunpack.c.h.b16 %v159
    %v273 = vunpack.c.l.b16 %v160
    %v274 = vunpack.c.h.b16 %v160
    %v275 = vunpack.c.l.b16 %v161
    %v276 = vunpack.c.h.b16 %v161
    %v277 = vunpack.c.l.b16 %v162
    %v278 = vunpack.c.h.b16 %v162
    %v279 = vunpack.c.l.b16 %v163
    %v280 = vunpack.c.h.b16 %v163
    %v281 = vunpack.c.l.b16 %v164
    %v282 = vunpack.c.h.b16 %v164
    %v283 = vpack.c.b16 %v223, %v219
    %v284 = vpack.c.b16 %v224, %v220
    %v285 = vpack.c.b16 %v225, %v221
    %v286 = vpack.c.b16 %v226, %v222
    %v287 = vpack.c.b16 %v231, %v227
    %v288 = vpack.c.b16 %v232, %v228
    %v289 = vpack.c.b16 %v233, %v229
    %v290 = vpack.c.b16 %v234, %v230
    %v291 = vpack.c.b16 %v239, %v235
    %v292 = vpack.c.b16 %v240, %v236
    %v293 = vpack.c.b16 %v241, %v237
    %v294 = vpack.c.b16 %v242, %v238
    %v295 = vpack.c.b16 %v247, %v243
    %v296 = vpack.c.b16 %v248, %v244
    %v297 = vpack.c.b16 %v249, %v245
    %v298 = vpack.c.b16 %v250, %v246
    %v299 = vpack.c.b16 %v255, %v251
    %v300 = vpack.c.b16 %v256, %v252
    %v301 = vpack.c.b16 %v257, %v253
    %v302 = vpack.c.b16 %v258, %v254
    %v303 = vpack.c.b16 %v263, %v259
    %v304 = vpack.c.b16 %v264, %v260
    %v305 = vpack.c.b16 %v265, %v261
    %v306 = vpack.c.b16 %v266, %v262
    %v307 = vpack.c.b16 %v271, %v267
    %v308 = vpack.c.b16 %v272, %v268
    %v309 = vpack.c.b16 %v273, %v269
    %v310 = vpack.c.b16 %v274, %v270
    %v311 = vpack.c.b16 %v279, %v275
    %v312 = vpack.c.b16 %v280, %v276
    %v313 = vpack.c.b16 %v281, %v277
    %v314 = vpack.c.b16 %v282, %v278
    %347 = vmatprep.subr.bf16.mxu0 %v312
    %348 = vmatpush1.bf16.msra.mxu0 %v311
    %349 = vmatprep.subr.bf16.mxu0 %v308
    %350 = vmatpush1.bf16.msra.mxu0 %v307
    %351 = vmatprep.subr.bf16.mxu0 %v304
    %352 = vmatpush1.bf16.msra.mxu0 %v303
    %353 = vmatprep.subr.bf16.mxu0 %v300
    %354 = vmatpush1.bf16.msra.mxu0 %v299
    %355 = vmatprep.subr.bf16.mxu0 %v296
    %356 = vmatpush1.bf16.msra.mxu0 %v295
    %357 = vmatprep.subr.bf16.mxu0 %v292
    %358 = vmatpush1.bf16.msra.mxu0 %v291
    %359 = vmatprep.subr.bf16.mxu0 %v288
    %360 = vmatpush1.bf16.msra.mxu0 %v287
    %361 = vmatprep.subr.bf16.mxu0 %v284
    %362 = vmatpush1.bf16.msra.mxu0 %v283
    %363 = vmatprep.subr.bf16.mxu0 0
    %364 = vmatpush2.bf16.msra.mxu0 0
    %365 = vmatprep.subr.bf16.mxu0 0
    %366 = vmatpush2.bf16.msra.mxu0 0
    %367 = vmatprep.subr.bf16.mxu0 0
    %368 = vmatpush2.bf16.msra.mxu0 0
    %369 = vmatprep.subr.bf16.mxu0 0
    %370 = vmatpush2.bf16.msra.mxu0 0
    %371 = vmatprep.subr.bf16.mxu0 0
    %372 = vmatpush2.bf16.msra.mxu0 0
    %373 = vmatprep.subr.bf16.mxu0 0
    %374 = vmatpush2.bf16.msra.mxu0 0
    %375 = vmatprep.subr.bf16.mxu0 0
    %376 = vmatpush2.bf16.msra.mxu0 0
    %377 = vmatprep.subr.bf16.mxu0 0
    %378 = vmatpush2.bf16.msra.mxu0 0
    %379 = vmatprep.mubr.bf16.mxu0 0
    %380 = vmatmul.mubr.bf16.gmra.mxu0 %v132
    %v381 = vpop.f32.mrf.mxu0
    %v382 = vadd.f32 %v170, %v381
    %v383 = vpop.f32.mrf.mxu0
    %v384 = vadd.f32 %v174, %v383
    %v385 = vpop.f32.mrf.mxu0
    %v386 = vpop.f32.mrf.mxu0
    %387 = vdwg.mxu0
    %388 = vmatprep.subr.bf16.mxu0 %v314
    %389 = vmatpush1.bf16.msra.mxu0 %v313
    %390 = vmatprep.subr.bf16.mxu0 %v310
    %391 = vmatpush1.bf16.msra.mxu0 %v309
    %392 = vmatprep.subr.bf16.mxu0 %v306
    %393 = vmatpush1.bf16.msra.mxu0 %v305
    %394 = vmatprep.subr.bf16.mxu0 %v302
    %395 = vmatpush1.bf16.msra.mxu0 %v301
    %396 = vmatprep.subr.bf16.mxu0 %v298
    %397 = vmatpush1.bf16.msra.mxu0 %v297
    %398 = vmatprep.subr.bf16.mxu0 %v294
    %399 = vmatpush1.bf16.msra.mxu0 %v293
    %400 = vmatprep.subr.bf16.mxu0 %v290
    %401 = vmatpush1.bf16.msra.mxu0 %v289
    %402 = vmatprep.subr.bf16.mxu0 %v286
    %403 = vmatpush1.bf16.msra.mxu0 %v285
    %404 = vmatprep.subr.bf16.mxu0 0
    %405 = vmatpush2.bf16.msra.mxu0 0
    %406 = vmatprep.subr.bf16.mxu0 0
    %407 = vmatpush2.bf16.msra.mxu0 0
    %408 = vmatprep.subr.bf16.mxu0 0
    %409 = vmatpush2.bf16.msra.mxu0 0
    %410 = vmatprep.subr.bf16.mxu0 0
    %411 = vmatpush2.bf16.msra.mxu0 0
    %412 = vmatprep.subr.bf16.mxu0 0
    %413 = vmatpush2.bf16.msra.mxu0 0
    %414 = vmatprep.subr.bf16.mxu0 0
    %415 = vmatpush2.bf16.msra.mxu0 0
    %416 = vmatprep.subr.bf16.mxu0 0
    %417 = vmatpush2.bf16.msra.mxu0 0
    %418 = vmatprep.subr.bf16.mxu0 0
    %419 = vmatpush2.bf16.msra.mxu0 0
    %420 = vmatprep.mubr.bf16.mxu0 0
    %421 = vmatmul.mubr.bf16.gmra.mxu0 %v132
    %v422 = vpop.f32.mrf.mxu0
    %v423 = vadd.f32 %v178, %v422
    %v424 = vpop.f32.mrf.mxu0
    %v425 = vadd.f32 %v182, %v424
    %v426 = vpop.f32.mrf.mxu0
    %v427 = vpop.f32.mrf.mxu0
    %428 = vdwg.mxu0
    %v429 = vmax.f32 %v382, 0.0
    %v430 = vmax.f32 %v384, 0.0
    %v431 = vmax.f32 %v423, 0.0
    %v432 = vmax.f32 %v425, 0.0
    %v433 = vpack.c.bf16 %v429, %v429
    %v434 = vpack.c.bf16 %v430, %v430
    %v435 = vpack.c.bf16 %v431, %v431
    %v436 = vpack.c.bf16 %v432, %v432
    %v437 = vld [vmem:[#allocation8] sm:$0xff]
    %v438 = vld [vmem:[#allocation8 + $0x8] sm:$0xff]
    %v439 = vld [vmem:[#allocation8 + $0x10] sm:$0xff]
    %v440 = vld [vmem:[#allocation8 + $0x18] sm:$0xff]
    %v441 = vld [vmem:[#allocation8 + $0x20] sm:$0xff]
    %v442 = vld [vmem:[#allocation8 + $0x28] sm:$0xff]
    %v443 = vld [vmem:[#allocation8 + $0x30] sm:$0xff]
    %v444 = vld [vmem:[#allocation8 + $0x38] sm:$0xff]
    %v445 = vld [vmem:[#allocation8 + $0x40] sm:$0xff]
    %v446 = vld [vmem:[#allocation8 + $0x48] sm:$0xff]
    %v447 = vld [vmem:[#allocation8 + $0x50] sm:$0xff]
    %v448 = vld [vmem:[#allocation8 + $0x58] sm:$0xff]
    %v449 = vld [vmem:[#allocation8 + $0x60] sm:$0xff]
    %v450 = vld [vmem:[#allocation8 + $0x68] sm:$0xff]
    %v451 = vld [vmem:[#allocation8 + $0x70] sm:$0xff]
    %v452 = vld [vmem:[#allocation8 + $0x78] sm:$0xff]
    %v453 = vld [vmem:[#allocation8 + $0x80] sm:$0xff]
    %v454 = vld [vmem:[#allocation8 + $0x88] sm:$0xff]
    %v455 = vld [vmem:[#allocation8 + $0x90] sm:$0xff]
    %v456 = vld [vmem:[#allocation8 + $0x98] sm:$0xff]
    %v457 = vld [vmem:[#allocation8 + $0xa0] sm:$0xff]
    %v458 = vld [vmem:[#allocation8 + $0xa8] sm:$0xff]
    %v459 = vld [vmem:[#allocation8 + $0xb0] sm:$0xff]
    %v460 = vld [vmem:[#allocation8 + $0xb8] sm:$0xff]
    %v461 = vld [vmem:[#allocation8 + $0xc0] sm:$0xff]
    %v462 = vld [vmem:[#allocation8 + $0xc8] sm:$0xff]
    %v463 = vld [vmem:[#allocation8 + $0xd0] sm:$0xff]
    %v464 = vld [vmem:[#allocation8 + $0xd8] sm:$0xff]
    %v465 = vld [vmem:[#allocation8 + $0xe0] sm:$0xff]
    %v466 = vld [vmem:[#allocation8 + $0xe8] sm:$0xff]
    %v467 = vld [vmem:[#allocation8 + $0xf0] sm:$0xff]
    %v468 = vld [vmem:[#allocation8 + $0xf8] sm:$0xff]
    %v469 = vld [vmem:[#allocation8 + $0x100] sm:$0xff]
    %v470 = vld [vmem:[#allocation8 + $0x108] sm:$0xff]
    %v471 = vld [vmem:[#allocation8 + $0x110] sm:$0xff]
    %v472 = vld [vmem:[#allocation8 + $0x118] sm:$0xff]
    %v473 = vld [vmem:[#allocation8 + $0x120] sm:$0xff]
    %v474 = vld [vmem:[#allocation8 + $0x128] sm:$0xff]
    %v475 = vld [vmem:[#allocation8 + $0x130] sm:$0xff]
    %v476 = vld [vmem:[#allocation8 + $0x138] sm:$0xff]
    %v477 = vld [vmem:[#allocation8 + $0x140] sm:$0xff]
    %v478 = vld [vmem:[#allocation8 + $0x148] sm:$0xff]
    %v479 = vld [vmem:[#allocation8 + $0x150] sm:$0xff]
    %v480 = vld [vmem:[#allocation8 + $0x158] sm:$0xff]
    %v481 = vld [vmem:[#allocation8 + $0x160] sm:$0xff]
    %v482 = vld [vmem:[#allocation8 + $0x168] sm:$0xff]
    %v483 = vld [vmem:[#allocation8 + $0x170] sm:$0xff]
    %v484 = vld [vmem:[#allocation8 + $0x178] sm:$0xff]
    %v485 = vld [vmem:[#allocation8 + $0x180] sm:$0xff]
    %v486 = vld [vmem:[#allocation8 + $0x188] sm:$0xff]
    %v487 = vld [vmem:[#allocation8 + $0x190] sm:$0xff]
    %v488 = vld [vmem:[#allocation8 + $0x198] sm:$0xff]
    %v489 = vld [vmem:[#allocation8 + $0x1a0] sm:$0xff]
    %v490 = vld [vmem:[#allocation8 + $0x1a8] sm:$0xff]
    %v491 = vld [vmem:[#allocation8 + $0x1b0] sm:$0xff]
    %v492 = vld [vmem:[#allocation8 + $0x1b8] sm:$0xff]
    %v493 = vld [vmem:[#allocation8 + $0x1c0] sm:$0xff]
    %v494 = vld [vmem:[#allocation8 + $0x1c8] sm:$0xff]
    %v495 = vld [vmem:[#allocation8 + $0x1d0] sm:$0xff]
    %v496 = vld [vmem:[#allocation8 + $0x1d8] sm:$0xff]
    %v497 = vld [vmem:[#allocation8 + $0x1e0] sm:$0xff]
    %v498 = vld [vmem:[#allocation8 + $0x1e8] sm:$0xff]
    %v499 = vld [vmem:[#allocation8 + $0x1f0] sm:$0xff]
    %v500 = vld [vmem:[#allocation8 + $0x1f8] sm:$0xff]
    %v501 = vld [vmem:[%s4] sm:$0x3]
    %v503 = vlaneseq
    %v504 = vshrl.u32 %v503, 7
    %v505 = vsub.s32 0, %v504
    %v506 = vrot.slane %v501, %v505
    %v507 = vlaneseq
    %v508 = vshrl.u32 %v507, 7
    %v509 = vsub.s32 1, %v508
    %v510 = vrot.slane %v501, %v509
    %v577 = vunpack.c.l.b16 %v437
    %v578 = vunpack.c.h.b16 %v437
    %v579 = vunpack.c.l.b16 %v438
    %v580 = vunpack.c.h.b16 %v438
    %v581 = vunpack.c.l.b16 %v439
    %v582 = vunpack.c.h.b16 %v439
    %v583 = vunpack.c.l.b16 %v440
    %v584 = vunpack.c.h.b16 %v440
    %v585 = vunpack.c.l.b16 %v441
    %v586 = vunpack.c.h.b16 %v441
    %v587 = vunpack.c.l.b16 %v442
    %v588 = vunpack.c.h.b16 %v442
    %v589 = vunpack.c.l.b16 %v443
    %v590 = vunpack.c.h.b16 %v443
    %v591 = vunpack.c.l.b16 %v444
    %v592 = vunpack.c.h.b16 %v444
    %v593 = vunpack.c.l.b16 %v445
    %v594 = vunpack.c.h.b16 %v445
    %v595 = vunpack.c.l.b16 %v446
    %v596 = vunpack.c.h.b16 %v446
    %v597 = vunpack.c.l.b16 %v447
    %v598 = vunpack.c.h.b16 %v447
    %v599 = vunpack.c.l.b16 %v448
    %v600 = vunpack.c.h.b16 %v448
    %v601 = vunpack.c.l.b16 %v449
    %v602 = vunpack.c.h.b16 %v449
    %v603 = vunpack.c.l.b16 %v450
    %v604 = vunpack.c.h.b16 %v450
    %v605 = vunpack.c.l.b16 %v451
    %v606 = vunpack.c.h.b16 %v451
    %v607 = vunpack.c.l.b16 %v452
    %v608 = vunpack.c.h.b16 %v452
    %v609 = vunpack.c.l.b16 %v453
    %v610 = vunpack.c.h.b16 %v453
    %v611 = vunpack.c.l.b16 %v454
    %v612 = vunpack.c.h.b16 %v454
    %v613 = vunpack.c.l.b16 %v455
    %v614 = vunpack.c.h.b16 %v455
    %v615 = vunpack.c.l.b16 %v456
    %v616 = vunpack.c.h.b16 %v456
    %v617 = vunpack.c.l.b16 %v457
    %v618 = vunpack.c.h.b16 %v457
    %v619 = vunpack.c.l.b16 %v458
    %v620 = vunpack.c.h.b16 %v458
    %v621 = vunpack.c.l.b16 %v459
    %v622 = vunpack.c.h.b16 %v459
    %v623 = vunpack.c.l.b16 %v460
    %v624 = vunpack.c.h.b16 %v460
    %v625 = vunpack.c.l.b16 %v461
    %v626 = vunpack.c.h.b16 %v461
    %v627 = vunpack.c.l.b16 %v462
    %v628 = vunpack.c.h.b16 %v462
    %v629 = vunpack.c.l.b16 %v463
    %v630 = vunpack.c.h.b16 %v463
    %v631 = vunpack.c.l.b16 %v464
    %v632 = vunpack.c.h.b16 %v464
    %v633 = vunpack.c.l.b16 %v465
    %v634 = vunpack.c.h.b16 %v465
    %v635 = vunpack.c.l.b16 %v466
    %v636 = vunpack.c.h.b16 %v466
    %v637 = vunpack.c.l.b16 %v467
    %v638 = vunpack.c.h.b16 %v467
    %v639 = vunpack.c.l.b16 %v468
    %v640 = vunpack.c.h.b16 %v468
    %v641 = vunpack.c.l.b16 %v469
    %v642 = vunpack.c.h.b16 %v469
    %v643 = vunpack.c.l.b16 %v470
    %v644 = vunpack.c.h.b16 %v470
    %v645 = vunpack.c.l.b16 %v471
    %v646 = vunpack.c.h.b16 %v471
    %v647 = vunpack.c.l.b16 %v472
    %v648 = vunpack.c.h.b16 %v472
    %v649 = vunpack.c.l.b16 %v473
    %v650 = vunpack.c.h.b16 %v473
    %v651 = vunpack.c.l.b16 %v474
    %v652 = vunpack.c.h.b16 %v474
    %v653 = vunpack.c.l.b16 %v475
    %v654 = vunpack.c.h.b16 %v475
    %v655 = vunpack.c.l.b16 %v476
    %v656 = vunpack.c.h.b16 %v476
    %v657 = vunpack.c.l.b16 %v477
    %v658 = vunpack.c.h.b16 %v477
    %v659 = vunpack.c.l.b16 %v478
    %v660 = vunpack.c.h.b16 %v478
    %v661 = vunpack.c.l.b16 %v479
    %v662 = vunpack.c.h.b16 %v479
    %v663 = vunpack.c.l.b16 %v480
    %v664 = vunpack.c.h.b16 %v480
    %v665 = vunpack.c.l.b16 %v481
    %v666 = vunpack.c.h.b16 %v481
    %v667 = vunpack.c.l.b16 %v482
    %v668 = vunpack.c.h.b16 %v482
    %v669 = vunpack.c.l.b16 %v483
    %v670 = vunpack.c.h.b16 %v483
    %v671 = vunpack.c.l.b16 %v484
    %v672 = vunpack.c.h.b16 %v484
    %v673 = vunpack.c.l.b16 %v485
    %v674 = vunpack.c.h.b16 %v485
    %v675 = vunpack.c.l.b16 %v486
    %v676 = vunpack.c.h.b16 %v486
    %v677 = vunpack.c.l.b16 %v487
    %v678 = vunpack.c.h.b16 %v487
    %v679 = vunpack.c.l.b16 %v488
    %v680 = vunpack.c.h.b16 %v488
    %v681 = vunpack.c.l.b16 %v489
    %v682 = vunpack.c.h.b16 %v489
    %v683 = vunpack.c.l.b16 %v490
    %v684 = vunpack.c.h.b16 %v490
    %v685 = vunpack.c.l.b16 %v491
    %v686 = vunpack.c.h.b16 %v491
    %v687 = vunpack.c.l.b16 %v492
    %v688 = vunpack.c.h.b16 %v492
    %v689 = vunpack.c.l.b16 %v493
    %v690 = vunpack.c.h.b16 %v493
    %v691 = vunpack.c.l.b16 %v494
    %v692 = vunpack.c.h.b16 %v494
    %v693 = vunpack.c.l.b16 %v495
    %v694 = vunpack.c.h.b16 %v495
    %v695 = vunpack.c.l.b16 %v496
    %v696 = vunpack.c.h.b16 %v496
    %v697 = vunpack.c.l.b16 %v497
    %v698 = vunpack.c.h.b16 %v497
    %v699 = vunpack.c.l.b16 %v498
    %v700 = vunpack.c.h.b16 %v498
    %v701 = vunpack.c.l.b16 %v499
    %v702 = vunpack.c.h.b16 %v499
    %v703 = vunpack.c.l.b16 %v500
    %v704 = vunpack.c.h.b16 %v500
    %v705 = vpack.c.b16 %v579, %v577
    %v706 = vpack.c.b16 %v580, %v578
    %v707 = vpack.c.b16 %v583, %v581
    %v708 = vpack.c.b16 %v584, %v582
    %v709 = vpack.c.b16 %v587, %v585
    %v710 = vpack.c.b16 %v588, %v586
    %v711 = vpack.c.b16 %v591, %v589
    %v712 = vpack.c.b16 %v592, %v590
    %v713 = vpack.c.b16 %v595, %v593
    %v714 = vpack.c.b16 %v596, %v594
    %v715 = vpack.c.b16 %v599, %v597
    %v716 = vpack.c.b16 %v600, %v598
    %v717 = vpack.c.b16 %v603, %v601
    %v718 = vpack.c.b16 %v604, %v602
    %v719 = vpack.c.b16 %v607, %v605
    %v720 = vpack.c.b16 %v608, %v606
    %v721 = vpack.c.b16 %v611, %v609
    %v722 = vpack.c.b16 %v612, %v610
    %v723 = vpack.c.b16 %v615, %v613
    %v724 = vpack.c.b16 %v616, %v614
    %v725 = vpack.c.b16 %v619, %v617
    %v726 = vpack.c.b16 %v620, %v618
    %v727 = vpack.c.b16 %v623, %v621
    %v728 = vpack.c.b16 %v624, %v622
    %v729 = vpack.c.b16 %v627, %v625
    %v730 = vpack.c.b16 %v628, %v626
    %v731 = vpack.c.b16 %v631, %v629
    %v732 = vpack.c.b16 %v632, %v630
    %v733 = vpack.c.b16 %v635, %v633
    %v734 = vpack.c.b16 %v636, %v634
    %v735 = vpack.c.b16 %v639, %v637
    %v736 = vpack.c.b16 %v640, %v638
    %v737 = vpack.c.b16 %v643, %v641
    %v738 = vpack.c.b16 %v644, %v642
    %v739 = vpack.c.b16 %v647, %v645
    %v740 = vpack.c.b16 %v648, %v646
    %v741 = vpack.c.b16 %v651, %v649
    %v742 = vpack.c.b16 %v652, %v650
    %v743 = vpack.c.b16 %v655, %v653
    %v744 = vpack.c.b16 %v656, %v654
    %v745 = vpack.c.b16 %v659, %v657
    %v746 = vpack.c.b16 %v660, %v658
    %v747 = vpack.c.b16 %v663, %v661
    %v748 = vpack.c.b16 %v664, %v662
    %v749 = vpack.c.b16 %v667, %v665
    %v750 = vpack.c.b16 %v668, %v666
    %v751 = vpack.c.b16 %v671, %v669
    %v752 = vpack.c.b16 %v672, %v670
    %v753 = vpack.c.b16 %v675, %v673
    %v754 = vpack.c.b16 %v676, %v674
    %v755 = vpack.c.b16 %v679, %v677
    %v756 = vpack.c.b16 %v680, %v678
    %v757 = vpack.c.b16 %v683, %v681
    %v758 = vpack.c.b16 %v684, %v682
    %v759 = vpack.c.b16 %v687, %v685
    %v760 = vpack.c.b16 %v688, %v686
    %v761 = vpack.c.b16 %v691, %v689
    %v762 = vpack.c.b16 %v692, %v690
    %v763 = vpack.c.b16 %v695, %v693
    %v764 = vpack.c.b16 %v696, %v694
    %v765 = vpack.c.b16 %v699, %v697
    %v766 = vpack.c.b16 %v700, %v698
    %v767 = vpack.c.b16 %v703, %v701
    %v768 = vpack.c.b16 %v704, %v702
    %833 = vmatprep.subr.bf16.mxu0 %v720
    %834 = vmatpush1.bf16.msra.mxu0 %v719
    %835 = vmatprep.subr.bf16.mxu0 %v718
    %836 = vmatpush1.bf16.msra.mxu0 %v717
    %837 = vmatprep.subr.bf16.mxu0 %v716
    %838 = vmatpush1.bf16.msra.mxu0 %v715
    %839 = vmatprep.subr.bf16.mxu0 %v714
    %840 = vmatpush1.bf16.msra.mxu0 %v713
    %841 = vmatprep.subr.bf16.mxu0 %v712
    %842 = vmatpush1.bf16.msra.mxu0 %v711
    %843 = vmatprep.subr.bf16.mxu0 %v710
    %844 = vmatpush1.bf16.msra.mxu0 %v709
    %845 = vmatprep.subr.bf16.mxu0 %v708
    %846 = vmatpush1.bf16.msra.mxu0 %v707
    %847 = vmatprep.subr.bf16.mxu0 %v706
    %848 = vmatpush1.bf16.msra.mxu0 %v705
    %849 = vmatprep.subr.bf16.mxu0 %v736
    %850 = vmatpush2.bf16.msra.mxu0 %v735
    %851 = vmatprep.subr.bf16.mxu0 %v734
    %852 = vmatpush2.bf16.msra.mxu0 %v733
    %853 = vmatprep.subr.bf16.mxu0 %v732
    %854 = vmatpush2.bf16.msra.mxu0 %v731
    %855 = vmatprep.subr.bf16.mxu0 %v730
    %856 = vmatpush2.bf16.msra.mxu0 %v729
    %857 = vmatprep.subr.bf16.mxu0 %v728
    %858 = vmatpush2.bf16.msra.mxu0 %v727
    %859 = vmatprep.subr.bf16.mxu0 %v726
    %860 = vmatpush2.bf16.msra.mxu0 %v725
    %861 = vmatprep.subr.bf16.mxu0 %v724
    %862 = vmatpush2.bf16.msra.mxu0 %v723
    %863 = vmatprep.subr.bf16.mxu0 %v722
    %864 = vmatpush2.bf16.msra.mxu0 %v721
    %865 = vmatprep.mubr.bf16.mxu0 %v434
    %866 = vmatmul.mubr.bf16.gmra.mxu0 %v433
    %v867 = vpop.f32.mrf.mxu0
    %v868 = vadd.f32 %v506, %v867
    %v869 = vpop.f32.mrf.mxu0
    %v870 = vadd.f32 %v510, %v869
    %v871 = vpop.f32.mrf.mxu0
    %v872 = vpop.f32.mrf.mxu0
    %873 = vdwg.mxu0
    %874 = vmatprep.subr.bf16.mxu0 %v752
    %875 = vmatpush1.bf16.msra.mxu0 %v751
    %876 = vmatprep.subr.bf16.mxu0 %v750
    %877 = vmatpush1.bf16.msra.mxu0 %v749
    %878 = vmatprep.subr.bf16.mxu0 %v748
    %879 = vmatpush1.bf16.msra.mxu0 %v747
    %880 = vmatprep.subr.bf16.mxu0 %v746
    %881 = vmatpush1.bf16.msra.mxu0 %v745
    %882 = vmatprep.subr.bf16.mxu0 %v744
    %883 = vmatpush1.bf16.msra.mxu0 %v743
    %884 = vmatprep.subr.bf16.mxu0 %v742
    %885 = vmatpush1.bf16.msra.mxu0 %v741
    %886 = vmatprep.subr.bf16.mxu0 %v740
    %887 = vmatpush1.bf16.msra.mxu0 %v739
    %888 = vmatprep.subr.bf16.mxu0 %v738
    %889 = vmatpush1.bf16.msra.mxu0 %v737
    %890 = vmatprep.subr.bf16.mxu0 %v768
    %891 = vmatpush2.bf16.msra.mxu0 %v767
    %892 = vmatprep.subr.bf16.mxu0 %v766
    %893 = vmatpush2.bf16.msra.mxu0 %v765
    %894 = vmatprep.subr.bf16.mxu0 %v764
    %895 = vmatpush2.bf16.msra.mxu0 %v763
    %896 = vmatprep.subr.bf16.mxu0 %v762
    %897 = vmatpush2.bf16.msra.mxu0 %v761
    %898 = vmatprep.subr.bf16.mxu0 %v760
    %899 = vmatpush2.bf16.msra.mxu0 %v759
    %900 = vmatprep.subr.bf16.mxu0 %v758
    %901 = vmatpush2.bf16.msra.mxu0 %v757
    %902 = vmatprep.subr.bf16.mxu0 %v756
    %903 = vmatpush2.bf16.msra.mxu0 %v755
    %904 = vmatprep.subr.bf16.mxu0 %v754
    %905 = vmatpush2.bf16.msra.mxu0 %v753
    %906 = vmatprep.mubr.bf16.mxu0 %v436
    %907 = vmatmul.mubr.bf16.gmra.mxu0 %v435
    %v908 = vpop.f32.mrf.mxu0
    %v909 = vadd.f32 %v868, %v908
    %v910 = vpop.f32.mrf.mxu0
    %v911 = vadd.f32 %v870, %v910
    %v912 = vpop.f32.mrf.mxu0
    %v913 = vpop.f32.mrf.mxu0
    %914 = vdwg.mxu0
    %v915 = vmax.f32 %v909, 0.0
    %v916 = vmax.f32 %v911, 0.0
    %v917 = vpack.c.bf16 %v915, %v915
    %v918 = vpack.c.bf16 %v916, %v916
    %v919 = vld [vmem:[#allocation10] sm:$0xf]
    %v920 = vld [vmem:[#allocation10 + $0x4] sm:$0xf]
    %v921 = vld [vmem:[#allocation10 + $0x8] sm:$0xf]
    %v922 = vld [vmem:[#allocation10 + $0xc] sm:$0xf]
    %v923 = vld [vmem:[#allocation10 + $0x10] sm:$0xf]
    %v924 = vld [vmem:[#allocation10 + $0x14] sm:$0xf]
    %v925 = vld [vmem:[#allocation10 + $0x18] sm:$0xf]
    %v926 = vld [vmem:[#allocation10 + $0x1c] sm:$0xf]
    %v927 = vld [vmem:[#allocation10 + $0x20] sm:$0xf]
    %v928 = vld [vmem:[#allocation10 + $0x24] sm:$0xf]
    %v929 = vld [vmem:[#allocation10 + $0x28] sm:$0xf]
    %v930 = vld [vmem:[#allocation10 + $0x2c] sm:$0xf]
    %v931 = vld [vmem:[#allocation10 + $0x30] sm:$0xf]
    %v932 = vld [vmem:[#allocation10 + $0x34] sm:$0xf]
    %v933 = vld [vmem:[#allocation10 + $0x38] sm:$0xf]
    %v934 = vld [vmem:[#allocation10 + $0x3c] sm:$0xf]
    %v935 = vld [vmem:[#allocation10 + $0x40] sm:$0xf]
    %v936 = vld [vmem:[#allocation10 + $0x44] sm:$0xf]
    %v937 = vld [vmem:[#allocation10 + $0x48] sm:$0xf]
    %v938 = vld [vmem:[#allocation10 + $0x4c] sm:$0xf]
    %v939 = vld [vmem:[#allocation10 + $0x50] sm:$0xf]
    %v940 = vld [vmem:[#allocation10 + $0x54] sm:$0xf]
    %v941 = vld [vmem:[#allocation10 + $0x58] sm:$0xf]
    %v942 = vld [vmem:[#allocation10 + $0x5c] sm:$0xf]
    %v943 = vld [vmem:[#allocation10 + $0x60] sm:$0xf]
    %v944 = vld [vmem:[#allocation10 + $0x64] sm:$0xf]
    %v945 = vld [vmem:[#allocation10 + $0x68] sm:$0xf]
    %v946 = vld [vmem:[#allocation10 + $0x6c] sm:$0xf]
    %v947 = vld [vmem:[#allocation10 + $0x70] sm:$0xf]
    %v948 = vld [vmem:[#allocation10 + $0x74] sm:$0xf]
    %v949 = vld [vmem:[#allocation10 + $0x78] sm:$0xf]
    %v950 = vld [vmem:[#allocation10 + $0x7c] sm:$0xf]
    %v951 = vld [vmem:[%s6] sm:$0x1]
    %v953 = vlaneseq
    %v954 = vshrl.u32 %v953, 7
    %v955 = vsub.s32 0, %v954
    %v956 = vrot.slane %v951, %v955
    %v990 = vunpack.c.l.b16 %v919
    %v991 = vunpack.c.l.b16 %v920
    %v992 = vunpack.c.l.b16 %v921
    %v993 = vunpack.c.l.b16 %v922
    %v994 = vunpack.c.l.b16 %v923
    %v995 = vunpack.c.l.b16 %v924
    %v996 = vunpack.c.l.b16 %v925
    %v997 = vunpack.c.l.b16 %v926
    %v998 = vunpack.c.l.b16 %v927
    %v999 = vunpack.c.l.b16 %v928
    %v1000 = vunpack.c.l.b16 %v929
    %v1001 = vunpack.c.l.b16 %v930
    %v1002 = vunpack.c.l.b16 %v931
    %v1003 = vunpack.c.l.b16 %v932
    %v1004 = vunpack.c.l.b16 %v933
    %v1005 = vunpack.c.l.b16 %v934
    %v1006 = vunpack.c.l.b16 %v935
    %v1007 = vunpack.c.l.b16 %v936
    %v1008 = vunpack.c.l.b16 %v937
    %v1009 = vunpack.c.l.b16 %v938
    %v1010 = vunpack.c.l.b16 %v939
    %v1011 = vunpack.c.l.b16 %v940
    %v1012 = vunpack.c.l.b16 %v941
    %v1013 = vunpack.c.l.b16 %v942
    %v1014 = vunpack.c.l.b16 %v943
    %v1015 = vunpack.c.l.b16 %v944
    %v1016 = vunpack.c.l.b16 %v945
    %v1017 = vunpack.c.l.b16 %v946
    %v1018 = vunpack.c.l.b16 %v947
    %v1019 = vunpack.c.l.b16 %v948
    %v1020 = vunpack.c.l.b16 %v949
    %v1021 = vunpack.c.l.b16 %v950
    %v1022 = vpack.c.b16 %v991, %v990
    %v1023 = vpack.c.b16 %v993, %v992
    %v1024 = vpack.c.b16 %v995, %v994
    %v1025 = vpack.c.b16 %v997, %v996
    %v1026 = vpack.c.b16 %v999, %v998
    %v1027 = vpack.c.b16 %v1001, %v1000
    %v1028 = vpack.c.b16 %v1003, %v1002
    %v1029 = vpack.c.b16 %v1005, %v1004
    %v1030 = vpack.c.b16 %v1007, %v1006
    %v1031 = vpack.c.b16 %v1009, %v1008
    %v1032 = vpack.c.b16 %v1011, %v1010
    %v1033 = vpack.c.b16 %v1013, %v1012
    %v1034 = vpack.c.b16 %v1015, %v1014
    %v1035 = vpack.c.b16 %v1017, %v1016
    %v1036 = vpack.c.b16 %v1019, %v1018
    %v1037 = vpack.c.b16 %v1021, %v1020
    %1054 = vmatprep.subr.bf16.mxu0 0
    %1055 = vmatpush1.bf16.msra.mxu0 %v1029
    %1056 = vmatprep.subr.bf16.mxu0 0
    %1057 = vmatpush1.bf16.msra.mxu0 %v1028
    %1058 = vmatprep.subr.bf16.mxu0 0
    %1059 = vmatpush1.bf16.msra.mxu0 %v1027
    %1060 = vmatprep.subr.bf16.mxu0 0
    %1061 = vmatpush1.bf16.msra.mxu0 %v1026
    %1062 = vmatprep.subr.bf16.mxu0 0
    %1063 = vmatpush1.bf16.msra.mxu0 %v1025
    %1064 = vmatprep.subr.bf16.mxu0 0
    %1065 = vmatpush1.bf16.msra.mxu0 %v1024
    %1066 = vmatprep.subr.bf16.mxu0 0
    %1067 = vmatpush1.bf16.msra.mxu0 %v1023
    %1068 = vmatprep.subr.bf16.mxu0 0
    %1069 = vmatpush1.bf16.msra.mxu0 %v1022
    %1070 = vmatprep.subr.bf16.mxu0 0
    %1071 = vmatpush2.bf16.msra.mxu0 %v1037
    %1072 = vmatprep.subr.bf16.mxu0 0
    %1073 = vmatpush2.bf16.msra.mxu0 %v1036
    %1074 = vmatprep.subr.bf16.mxu0 0
    %1075 = vmatpush2.bf16.msra.mxu0 %v1035
    %1076 = vmatprep.subr.bf16.mxu0 0
    %1077 = vmatpush2.bf16.msra.mxu0 %v1034
    %1078 = vmatprep.subr.bf16.mxu0 0
    %1079 = vmatpush2.bf16.msra.mxu0 %v1033
    %1080 = vmatprep.subr.bf16.mxu0 0
    %1081 = vmatpush2.bf16.msra.mxu0 %v1032
    %1082 = vmatprep.subr.bf16.mxu0 0
    %1083 = vmatpush2.bf16.msra.mxu0 %v1031
    %1084 = vmatprep.subr.bf16.mxu0 0
    %1085 = vmatpush2.bf16.msra.mxu0 %v1030
    %1086 = vmatprep.mubr.bf16.mxu0 %v918
    %1087 = vmatmul.mubr.bf16.gmra.mxu0 %v917
    %v1088 = vpop.f32.mrf.mxu0
    %v1089 = vadd.f32 %v956, %v1088
    %v1090 = vpop.f32.mrf.mxu0
    %v1091 = vpop.f32.mrf.mxu0
    %v1092 = vpop.f32.mrf.mxu0
    %1093 = vdwg.mxu0
    %v1094 = vmax.f32 %v1089, 0.0
    %v1095 = vpack.c.bf16 %v1094, %v1094
    %v1096 = vld [vmem:[#allocation11] sm:$0xf]
    %v1097 = vld [vmem:[#allocation11 + $0x4] sm:$0xf]
    %v1098 = vld [vmem:[#allocation11 + $0x8] sm:$0xf]
    %v1099 = vld [vmem:[#allocation11 + $0xc] sm:$0xf]
    %v1100 = vld [vmem:[#allocation11 + $0x10] sm:$0xf]
    %v1101 = vld [vmem:[#allocation11 + $0x14] sm:$0xf]
    %v1102 = vld [vmem:[#allocation11 + $0x18] sm:$0xf]
    %v1103 = vld [vmem:[#allocation11 + $0x1c] sm:$0xf]
    %v1104 = vld [vmem:[#allocation11 + $0x20] sm:$0xf]
    %v1105 = vld [vmem:[#allocation11 + $0x24] sm:$0xf]
    %v1106 = vld [vmem:[#allocation11 + $0x28] sm:$0xf]
    %v1107 = vld [vmem:[#allocation11 + $0x2c] sm:$0xf]
    %v1108 = vld [vmem:[#allocation11 + $0x30] sm:$0xf]
    %v1109 = vld [vmem:[#allocation11 + $0x34] sm:$0xf]
    %v1110 = vld [vmem:[#allocation11 + $0x38] sm:$0xf]
    %v1111 = vld [vmem:[#allocation11 + $0x3c] sm:$0xf]
    %v1112 = vld [vmem:[%s8] sm:$0x1]
    %v1114 = vlaneseq
    %v1115 = vshrl.u32 %v1114, 7
    %v1116 = vsub.s32 0, %v1115
    %v1117 = vrot.slane %v1112, %v1116
    %v1135 = vunpack.c.l.b16 %v1096
    %v1136 = vunpack.c.l.b16 %v1097
    %v1137 = vunpack.c.l.b16 %v1098
    %v1138 = vunpack.c.l.b16 %v1099
    %v1139 = vunpack.c.l.b16 %v1100
    %v1140 = vunpack.c.l.b16 %v1101
    %v1141 = vunpack.c.l.b16 %v1102
    %v1142 = vunpack.c.l.b16 %v1103
    %v1143 = vunpack.c.l.b16 %v1104
    %v1144 = vunpack.c.l.b16 %v1105
    %v1145 = vunpack.c.l.b16 %v1106
    %v1146 = vunpack.c.l.b16 %v1107
    %v1147 = vunpack.c.l.b16 %v1108
    %v1148 = vunpack.c.l.b16 %v1109
    %v1149 = vunpack.c.l.b16 %v1110
    %v1150 = vunpack.c.l.b16 %v1111
    %v1151 = vpack.c.b16 %v1136, %v1135
    %v1152 = vpack.c.b16 %v1138, %v1137
    %v1153 = vpack.c.b16 %v1140, %v1139
    %v1154 = vpack.c.b16 %v1142, %v1141
    %v1155 = vpack.c.b16 %v1144, %v1143
    %v1156 = vpack.c.b16 %v1146, %v1145
    %v1157 = vpack.c.b16 %v1148, %v1147
    %v1158 = vpack.c.b16 %v1150, %v1149
    %1167 = vmatprep.subr.bf16.mxu0 0
    %1168 = vmatpush1.bf16.msra.mxu0 %v1158
    %1169 = vmatprep.subr.bf16.mxu0 0
    %1170 = vmatpush1.bf16.msra.mxu0 %v1157
    %1171 = vmatprep.subr.bf16.mxu0 0
    %1172 = vmatpush1.bf16.msra.mxu0 %v1156
    %1173 = vmatprep.subr.bf16.mxu0 0
    %1174 = vmatpush1.bf16.msra.mxu0 %v1155
    %1175 = vmatprep.subr.bf16.mxu0 0
    %1176 = vmatpush1.bf16.msra.mxu0 %v1154
    %1177 = vmatprep.subr.bf16.mxu0 0
    %1178 = vmatpush1.bf16.msra.mxu0 %v1153
    %1179 = vmatprep.subr.bf16.mxu0 0
    %1180 = vmatpush1.bf16.msra.mxu0 %v1152
    %1181 = vmatprep.subr.bf16.mxu0 0
    %1182 = vmatpush1.bf16.msra.mxu0 %v1151
    %1183 = vmatprep.subr.bf16.mxu0 0
    %1184 = vmatpush2.bf16.msra.mxu0 0
    %1185 = vmatprep.subr.bf16.mxu0 0
    %1186 = vmatpush2.bf16.msra.mxu0 0
    %1187 = vmatprep.subr.bf16.mxu0 0
    %1188 = vmatpush2.bf16.msra.mxu0 0
    %1189 = vmatprep.subr.bf16.mxu0 0
    %1190 = vmatpush2.bf16.msra.mxu0 0
    %1191 = vmatprep.subr.bf16.mxu0 0
    %1192 = vmatpush2.bf16.msra.mxu0 0
    %1193 = vmatprep.subr.bf16.mxu0 0
    %1194 = vmatpush2.bf16.msra.mxu0 0
    %1195 = vmatprep.subr.bf16.mxu0 0
    %1196 = vmatpush2.bf16.msra.mxu0 0
    %1197 = vmatprep.subr.bf16.mxu0 0
    %1198 = vmatpush2.bf16.msra.mxu0 0
    %1199 = vmatprep.mubr.bf16.mxu0 0
    %1200 = vmatmul.mubr.bf16.gmra.mxu0 %v1095
    %v1201 = vpop.f32.mrf.mxu0
    %v1202 = vadd.f32 %v1117, %v1201
    %v1203 = vpop.f32.mrf.mxu0
    %v1204 = vpop.f32.mrf.mxu0
    %v1205 = vpop.f32.mrf.mxu0
    %1206 = vdwg.mxu0
    %v1207 = vmax.f32 %v1202, 0.0
    %v1208 = vpack.c.bf16 %v1207, %v1207
    %v1209 = vld [vmem:[#allocation13] sm:$0xf]
    %v1210 = vld [vmem:[#allocation13 + $0x4] sm:$0xf]
    %v1211 = vld [vmem:[#allocation13 + $0x8] sm:$0xf]
    %v1212 = vld [vmem:[#allocation13 + $0xc] sm:$0xf]
    %v1213 = vld [vmem:[#allocation13 + $0x10] sm:$0xf]
    %v1214 = vld [vmem:[#allocation13 + $0x14] sm:$0xf]
    %v1215 = vld [vmem:[#allocation13 + $0x18] sm:$0xf]
    %v1216 = vld [vmem:[#allocation13 + $0x1c] sm:$0xf]
    %v1217 = vld [vmem:[#allocation13 + $0x20] sm:$0xf]
    %v1218 = vld [vmem:[#allocation13 + $0x24] sm:$0xf]
    %v1219 = vld [vmem:[#allocation13 + $0x28] sm:$0xf]
    %v1220 = vld [vmem:[#allocation13 + $0x2c] sm:$0xf]
    %v1221 = vld [vmem:[#allocation13 + $0x30] sm:$0xf]
    %v1222 = vld [vmem:[#allocation13 + $0x34] sm:$0xf]
    %v1223 = vld [vmem:[#allocation13 + $0x38] sm:$0xf]
    %v1224 = vld [vmem:[#allocation13 + $0x3c] sm:$0xf]
    %v1225 = vld [vmem:[%s10] sm:$0x1]
    %v1227 = vlaneseq
    %v1228 = vshrl.u32 %v1227, 7
    %v1229 = vsub.s32 0, %v1228
    %v1230 = vrot.slane %v1225, %v1229
    %v1248 = vunpack.c.l.b16 %v1209
    %v1249 = vunpack.c.l.b16 %v1210
    %v1250 = vunpack.c.l.b16 %v1211
    %v1251 = vunpack.c.l.b16 %v1212
    %v1252 = vunpack.c.l.b16 %v1213
    %v1253 = vunpack.c.l.b16 %v1214
    %v1254 = vunpack.c.l.b16 %v1215
    %v1255 = vunpack.c.l.b16 %v1216
    %v1256 = vunpack.c.l.b16 %v1217
    %v1257 = vunpack.c.l.b16 %v1218
    %v1258 = vunpack.c.l.b16 %v1219
    %v1259 = vunpack.c.l.b16 %v1220
    %v1260 = vunpack.c.l.b16 %v1221
    %v1261 = vunpack.c.l.b16 %v1222
    %v1262 = vunpack.c.l.b16 %v1223
    %v1263 = vunpack.c.l.b16 %v1224
    %v1264 = vpack.c.b16 %v1249, %v1248
    %v1265 = vpack.c.b16 %v1251, %v1250
    %v1266 = vpack.c.b16 %v1253, %v1252
    %v1267 = vpack.c.b16 %v1255, %v1254
    %v1268 = vpack.c.b16 %v1257, %v1256
    %v1269 = vpack.c.b16 %v1259, %v1258
    %v1270 = vpack.c.b16 %v1261, %v1260
    %v1271 = vpack.c.b16 %v1263, %v1262
    %1280 = vmatprep.subr.bf16.mxu0 0
    %1281 = vmatpush1.bf16.msra.mxu0 %v1271
    %1282 = vmatprep.subr.bf16.mxu0 0
    %1283 = vmatpush1.bf16.msra.mxu0 %v1270
    %1284 = vmatprep.subr.bf16.mxu0 0
    %1285 = vmatpush1.bf16.msra.mxu0 %v1269
    %1286 = vmatprep.subr.bf16.mxu0 0
    %1287 = vmatpush1.bf16.msra.mxu0 %v1268
    %1288 = vmatprep.subr.bf16.mxu0 0
    %1289 = vmatpush1.bf16.msra.mxu0 %v1267
    %1290 = vmatprep.subr.bf16.mxu0 0
    %1291 = vmatpush1.bf16.msra.mxu0 %v1266
    %1292 = vmatprep.subr.bf16.mxu0 0
    %1293 = vmatpush1.bf16.msra.mxu0 %v1265
    %1294 = vmatprep.subr.bf16.mxu0 0
    %1295 = vmatpush1.bf16.msra.mxu0 %v1264
    %1296 = vmatprep.subr.bf16.mxu0 0
    %1297 = vmatpush2.bf16.msra.mxu0 0
    %1298 = vmatprep.subr.bf16.mxu0 0
    %1299 = vmatpush2.bf16.msra.mxu0 0
    %1300 = vmatprep.subr.bf16.mxu0 0
    %1301 = vmatpush2.bf16.msra.mxu0 0
    %1302 = vmatprep.subr.bf16.mxu0 0
    %1303 = vmatpush2.bf16.msra.mxu0 0
    %1304 = vmatprep.subr.bf16.mxu0 0
    %1305 = vmatpush2.bf16.msra.mxu0 0
    %1306 = vmatprep.subr.bf16.mxu0 0
    %1307 = vmatpush2.bf16.msra.mxu0 0
    %1308 = vmatprep.subr.bf16.mxu0 0
    %1309 = vmatpush2.bf16.msra.mxu0 0
    %1310 = vmatprep.subr.bf16.mxu0 0
    %1311 = vmatpush2.bf16.msra.mxu0 0
    %1312 = vmatprep.mubr.bf16.mxu0 0
    %1313 = vmatmul.mubr.bf16.gmra.mxu0 %v1208
    %v1314 = vpop.f32.mrf.mxu0
    %v1315 = vadd.f32 %v1230, %v1314
    %v1316 = vpop.f32.mrf.mxu0
    %v1317 = vpop.f32.mrf.mxu0
    %v1318 = vpop.f32.mrf.mxu0
    %1319 = vdwg.mxu0
    %1320 = vst [vmem:[#allocation14] sm:$0xff] %v1315
    // Predicated region
    $region74: #{tpu_custom_call.1} parent=1 // pred_check
      _
    $region75: #{tpu_custom_call.1} parent=1 // pred_check_branch
      %1322 = sbr.rel (0) target = $region77
    $region76: #{tpu_custom_call.1} parent=1 // pred_region
      %s1324 = ssub.s32 128, 128
      %1325 = vsyncadd [#allocation4], %s1324
      %s1327 = sshll.u32 [#allocation14], 4
      %s1328 = int_to_ptr.vmem [resolvable:$true] %s1327
      %1330 = dma.vmem_to_hbm [thread:$0]  %s1328, 128, %s11, [#allocation4]
    $region77: #{tpu_custom_call.1} parent=1 // pred_fallthru
      _
    // Predicated region
    $region78: #{tpu_custom_call.1} parent=1 // pred_check
      _
    $region79: #{tpu_custom_call.1} parent=1 // pred_check_branch
      %1332 = sbr.rel (0) target = $region81
    $region80: #{tpu_custom_call.1} parent=1 // pred_region
      %1333 = dma.done [#allocation4], 128
    $region81: #{tpu_custom_call.1} parent=1 // pred_fallthru
      _
    %1334 = vsyncpa [#allocation3], 1
    %1335 = vsyncpa [#allocation6], 1
    %1336 = vsyncpa [#allocation9], 1
    %1337 = vsyncpa [#allocation12], 1
    %1338 = vsyncpa [#allocation4], 1

</llo_original>
